<compile_context>
chip_gen: v5e
topology: v5e:2x2
jax: 0.10.0
libtpu: 0.0.40
codegen_flags: <defaults>
</compile_context>

<pallas_src>
import functools

import jax
import jax.numpy as jnp
from jax.experimental import pallas as pl
from jax.experimental.pallas import tpu as pltpu


# ---- zero-padded unit shifts -------------------------------------------------

def _shift_concat(x, axis, delta):
    """Zero-padded unit shift via slice+concat (fallback for vreg-unaligned blocks)."""
    n = x.shape[axis]
    zeros = jnp.zeros_like(jax.lax.slice_in_dim(x, 0, 1, axis=axis))
    if delta > 0:    # out[i] = x[i-1], zero at i == 0
        body = jax.lax.slice_in_dim(x, 0, n - 1, axis=axis)
        return jnp.concatenate([zeros, body], axis=axis)
    else:            # out[i] = x[i+1], zero at i == n-1
        body = jax.lax.slice_in_dim(x, 1, n, axis=axis)
        return jnp.concatenate([body, zeros], axis=axis)


def _corr3(x, taps, axis, aligned):
    """3-tap zero-padded cross-correlation along `axis` of a (B, H, W) tile:
       out[i] = t0*x[i-1] + t1*x[i] + t2*x[i+1].  Zero taps vanish at trace time."""
    t0, t1, t2 = taps
    n = x.shape[axis]

    idx = None
    if aligned and (t0 != 0.0 or t2 != 0.0):
        # Edge mask hoisted once per axis: 2-D iota over (H, W), broadcast over batch.
        idx = jax.lax.broadcasted_iota(jnp.int32, x.shape[1:], axis - 1)[None]

    def shifted(delta):
        if aligned:
            # pltpu.roll(x, s)[i] == x[(i - s) mod n]; use positive static shifts only.
            rolled = pltpu.roll(x, 1 if delta > 0 else n - 1, axis)
            keep = (idx >= 1) if delta > 0 else (idx <= n - 2)
            return jnp.where(keep, rolled, 0.0)
        return _shift_concat(x, axis, delta)

    acc = None
    for coef, make in ((t0, lambda: shifted(+1)),
                       (t1, lambda: x),
                       (t2, lambda: shifted(-1))):
        if coef == 0.0:
            continue
        v = make()
        if coef == 1.0:
            acc = v if acc is None else acc + v
        elif coef == -1.0:
            acc = -v if acc is None else acc - v
        else:
            sv = coef * v
            acc = sv if acc is None else acc + sv
    return acc


# ---- kernel ------------------------------------------------------------------

def _sobel_mask_loss_kernel(gt_ref, pred_ref, mask_ref, out_ref, *,
                            scale, taps_h, taps_w, n_images, batch_block, ragged):
    # Upcast in-kernel: inputs stream HBM->VMEM in their native dtype (bf16 etc.).
    g = gt_ref[...].astype(jnp.float32)
    p = pred_ref[...].astype(jnp.float32)
    mk = mask_ref[...].astype(jnp.float32)

    # (mask*weight + add_ele)*factor == mask*scale + 1  with scale = weight-1 (1 if weight==1)
    m = mk + 1.0 if scale == 1.0 else mk * scale + 1.0

    # conv is linear -> one Sobel of the masked difference suffices.
    d = (g - p) * m                                              # (B, H, W) f32

    if ragged:
        # Last block is clipped at the array boundary; the tail of the VMEM buffer is
        # undefined, so select (not multiply) out-of-range batch rows to exactly zero.
        b_idx = jax.lax.broadcasted_iota(jnp.int32, d.shape, 0)
        rows_valid = n_images - pl.program_id(0) * batch_block
        d = jnp.where(b_idx < rows_valid, d, 0.0)

    _, H, W = d.shape
    aligned = (H % 8 == 0) and (W % 128 == 0)                    # pltpu.roll needs aligned tiles
    c = _corr3(d, taps_w, axis=2, aligned=aligned)               # 3-tap along W (lanes)
    s = _corr3(c, taps_h, axis=1, aligned=aligned)               # 3-tap along H (sublanes)

    partial = jnp.sum(jnp.abs(s))
    # Independent, lane-aligned (1, 8, 128) partial tile; final reduction in the wrapper.
    out_ref[...] = jnp.full(out_ref.shape, partial, out_ref.dtype)


# ---- wrapper -----------------------------------------------------------------

def sobel_mask_loss(gt, pred, mask, *, weight=1, direction='x', loss_weight=1.0,
                    batch_block=None):
    """JAX/Pallas equivalent of Sobel_Mask_Loss(weight).forward(gt, pred, mask, direction, loss_weight)."""
    assert weight >= 1, 'the input weight must be larger than 1'
    # Fold (mask*weight + add_ele)*factor to mask*scale + 1 at trace time.
    scale = 1.0 if weight == 1 else float(weight - 1)

    N, C, H, W = gt.shape
    assert C == 1, 'Sobel kernel is single-channel (C must be 1)'
    # NOTE: lane utilization is best when W is a multiple of 128; smaller/odd W still
    # runs (concat-shift fallback) but wastes lane throughput and DMA efficiency.
    g = gt.reshape(N, H, W)      # free reshape (C == 1); native dtype kept, upcast in-kernel
    p = pred.reshape(N, H, W)
    m = mask.reshape(N, H, W)

    # Separable Sobel taps (cross-correlation):  k[a, b] = taps_h[a] * taps_w[b]
    if direction == 'x':
        taps_h, taps_w = (1.0, 2.0, 1.0), (1.0, 0.0, -1.0)   # [[1,0,-1],[2,0,-2],[1,0,-1]]
    else:
        taps_h, taps_w = (1.0, 0.0, -1.0), (1.0, 2.0, 1.0)   # [[1,2,1],[0,0,0],[-1,-2,-1]]

    # Batch-block sizing: double-buffered inputs + f32 temporaries under ~40 MiB
    # (safe inside v7x's 64 MiB/TC VMEM; conservative for 128 MiB v5e/v6e), and keep
    # >= 4 grid steps when N allows so the "parallel" axis feeds both v7x TensorCores.
    in_itemsize = max(jnp.dtype(a.dtype).itemsize for a in (g, p, m))
    per_img_bytes = 3 * 2 * H * W * in_itemsize + 6 * H * W * 4
    b_cap = max(1, (40 * 1024 * 1024) // per_img_bytes)
    if batch_block is None:
        B = max(1, min(N, b_cap, pl.cdiv(N, 4)))
    else:
        B = max(1, min(N, int(batch_block)))
    num_blocks = pl.cdiv(N, B)
    ragged = num_blocks * B != N        # handled in-kernel; no wrapper jnp.pad HBM rewrite
    # TODO(synk): very large single images (H*W*4 of several MiB at B == 1) would need an
    # H-tiled variant with a 1-row halo to keep double-buffering on v7x; not implemented.

    kernel = functools.partial(
        _sobel_mask_loss_kernel,
        scale=scale, taps_h=taps_h, taps_w=taps_w,
        n_images=N, batch_block=B, ragged=ragged)

    partials = pl.pallas_call(
        kernel,
        out_shape=jax.ShapeDtypeStruct((num_blocks, 8, 128), jnp.float32),
        grid_spec=pltpu.PrefetchScalarGridSpec(
            num_scalar_prefetch=0,
            grid=(num_blocks,),
            in_specs=[
                pl.BlockSpec((B, H, W), lambda n: (n, 0, 0)),
                pl.BlockSpec((B, H, W), lambda n: (n, 0, 0)),
                pl.BlockSpec((B, H, W), lambda n: (n, 0, 0)),
            ],
            out_specs=pl.BlockSpec((1, 8, 128), lambda n: (n, 0, 0)),
        ),
        compiler_params=pltpu.CompilerParams(
            dimension_semantics=("parallel",),              # per-block partials are independent
            vmem_limit_bytes=48 * 1024 * 1024),             # > scoped defaults, < v7x physical
    )(g, p, m)

    loss = jnp.sum(partials[:, 0, 0]) / jnp.float32(N * H * W)
    if direction != 'x':
        # NOTE: loss_weight is intentionally applied only for direction != 'x',
        # mirroring the PyTorch module.
        loss = loss * jnp.float32(loss_weight)
    return loss


# ---- plain-JAX reference (sanity check) ---------------------------------------

def _reference(gt, pred, mask, weight=1, direction='x', loss_weight=1.0):
    add_ele = 1.0 if weight == 1 else weight / (weight - 1)
    factor = 1.0 / add_ele
    m = (mask * weight + add_ele) * factor
    g = gt * m
    p = pred * m
    kx = jnp.array([[1, 0, -1], [2, 0, -2], [1, 0, -1]], jnp.float32).reshape(1, 1, 3, 3)
    ky = jnp.array([[1, 2, 1], [0, 0, 0], [-1, -2, -1]], jnp.float32).reshape(1, 1, 3, 3)
    k = kx if direction == 'x' else ky
    conv = lambda x: jax.lax.conv_general_dilated(
        x, k, window_strides=(1, 1), padding=((1, 1), (1, 1)),
        dimension_numbers=('NCHW', 'OIHW', 'NCHW'),
        precision=jax.lax.Precision.HIGHEST)
    loss = jnp.mean(jnp.abs(conv(g) - conv(p)))
    return loss if direction == 'x' else loss * loss_weight


if __name__ == "__main__":
    key = jax.random.PRNGKey(0)
    k1, k2, k3, k4, k5, k6 = jax.random.split(key, 6)

    # Cases 1-2: small unaligned spatial dims (16x16) -> concat-shift fallback path.
    N, C, H, W = 2, 1, 16, 16
    gt = jax.random.normal(k1, (N, C, H, W), dtype=jnp.float32)
    pred = jax.random.normal(k2, (N, C, H, W), dtype=jnp.float32)
    mask = (jax.random.uniform(k3, (N, C, H, W)) > 0.5).astype(jnp.float32)

    loss_x = jax.block_until_ready(
        sobel_mask_loss(gt, pred, mask, weight=1, direction='x'))
    loss_y = jax.block_until_ready(
        sobel_mask_loss(gt, pred, mask, weight=3, direction='y', loss_weight=2.0))
    ref_x = _reference(gt, pred, mask, weight=1, direction='x')
    ref_y = _reference(gt, pred, mask, weight=3, direction='y', loss_weight=2.0)
    assert jnp.allclose(loss_x, ref_x, atol=1e-4, rtol=1e-4), (loss_x, ref_x)
    assert jnp.allclose(loss_y, ref_y, atol=1e-4, rtol=1e-4), (loss_y, ref_y)

    # Cases 3-4: lane-aligned W=128 (pltpu.roll path), bf16 inputs (in-kernel upcast),
    # N=5 with block B=2 -> ragged last block (in-kernel tail mask, no wrapper jnp.pad).
    N2, H2, W2 = 5, 16, 128
    gt2 = jax.random.normal(k4, (N2, 1, H2, W2), dtype=jnp.float32).astype(jnp.bfloat16)
    pred2 = jax.random.normal(k5, (N2, 1, H2, W2), dtype=jnp.float32).astype(jnp.bfloat16)
    mask2 = (jax.random.uniform(k6, (N2, 1, H2, W2)) > 0.5).astype(jnp.bfloat16)
    gt2_f, pred2_f, mask2_f = (a.astype(jnp.float32) for a in (gt2, pred2, mask2))

    loss3 = jax.block_until_ready(
        sobel_mask_loss(gt2, pred2, mask2, weight=1, direction='x', batch_block=2))
    loss4 = jax.block_until_ready(
        sobel_mask_loss(gt2, pred2, mask2, weight=2, direction='y', loss_weight=1.5))
    ref3 = _reference(gt2_f, pred2_f, mask2_f, weight=1, direction='x')
    ref4 = _reference(gt2_f, pred2_f, mask2_f, weight=2, direction='y', loss_weight=1.5)
    assert jnp.allclose(loss3, ref3, atol=1e-4, rtol=1e-3), (loss3, ref3)
    assert jnp.allclose(loss4, ref4, atol=1e-4, rtol=1e-3), (loss4, ref4)

    print("KERNEL_OK")
</pallas_src>

<mosaic_0001>
module attributes {stable_mosaic.version = 11 : i64} {
  func.func @_sobel_mask_loss_kernel(%arg0: i32, %arg1: memref<1x16x16xf32, #tpu.memory_space<vmem>>, %arg2: memref<1x16x16xf32, #tpu.memory_space<vmem>>, %arg3: memref<1x16x16xf32, #tpu.memory_space<vmem>>, %arg4: memref<1x8x128xf32, #tpu.memory_space<vmem>>) attributes {dimension_semantics = [#tpu.dimension_semantics<parallel>], iteration_bounds = array<i64: 2>, scalar_prefetch = 0 : i64, scratch_operands = 0 : i64, tpu.core_type = #tpu.core_type<tc>, window_params = [{transform_indices = @transform_0, window_bounds = array<i64: 1, 16, 16>}, {transform_indices = @transform_1, window_bounds = array<i64: 1, 16, 16>}, {transform_indices = @transform_2, window_bounds = array<i64: 1, 16, 16>}, {transform_indices = @transform_3, window_bounds = array<i64: 1, 8, 128>}]} {
    %c0 = arith.constant 0 : index
    %c0_0 = arith.constant 0 : index
    %c0_1 = arith.constant 0 : index
    %0 = vector.load %arg1[%c0, %c0_0, %c0_1] : memref<1x16x16xf32, #tpu.memory_space<vmem>>, vector<1x16x16xf32>
    %c0_2 = arith.constant 0 : index
    %c0_3 = arith.constant 0 : index
    %c0_4 = arith.constant 0 : index
    %1 = vector.load %arg2[%c0_2, %c0_3, %c0_4] : memref<1x16x16xf32, #tpu.memory_space<vmem>>, vector<1x16x16xf32>
    %c0_5 = arith.constant 0 : index
    %c0_6 = arith.constant 0 : index
    %c0_7 = arith.constant 0 : index
    %2 = vector.load %arg3[%c0_5, %c0_6, %c0_7] : memref<1x16x16xf32, #tpu.memory_space<vmem>>, vector<1x16x16xf32>
    %cst = arith.constant 1.000000e+00 : f32
    %3 = vector.broadcast %cst : f32 to vector<1x16x16xf32>
    %4 = arith.addf %2, %3 : vector<1x16x16xf32>
    %5 = arith.subf %0, %1 : vector<1x16x16xf32>
    %6 = arith.mulf %5, %4 : vector<1x16x16xf32>
    %cst_8 = arith.constant 0.000000e+00 : f32
    %7 = vector.broadcast %cst_8 : f32 to vector<1x16x1xf32>
    %8 = vector.extract_strided_slice %6 {offsets = [0, 0, 0], sizes = [1, 16, 15], strides = [1, 1, 1]} : vector<1x16x16xf32> to vector<1x16x15xf32>
    %9 = tpu.concatenate %7, %8 in 2 : vector<1x16x1xf32>, vector<1x16x15xf32> -> vector<1x16x16xf32>
    %cst_9 = arith.constant 0.000000e+00 : f32
    %10 = vector.broadcast %cst_9 : f32 to vector<1x16x1xf32>
    %11 = vector.extract_strided_slice %6 {offsets = [0, 0, 1], sizes = [1, 16, 15], strides = [1, 1, 1]} : vector<1x16x16xf32> to vector<1x16x15xf32>
    %12 = tpu.concatenate %11, %10 in 2 : vector<1x16x15xf32>, vector<1x16x1xf32> -> vector<1x16x16xf32>
    %13 = arith.subf %9, %12 : vector<1x16x16xf32>
    %cst_10 = arith.constant 0.000000e+00 : f32
    %14 = vector.broadcast %cst_10 : f32 to vector<1x1x16xf32>
    %15 = vector.extract_strided_slice %13 {offsets = [0, 0, 0], sizes = [1, 15, 16], strides = [1, 1, 1]} : vector<1x16x16xf32> to vector<1x15x16xf32>
    %16 = tpu.concatenate %14, %15 in 1 : vector<1x1x16xf32>, vector<1x15x16xf32> -> vector<1x16x16xf32>
    %cst_11 = arith.constant 2.000000e+00 : f32
    %17 = vector.broadcast %cst_11 : f32 to vector<1x16x16xf32>
    %18 = arith.mulf %17, %13 : vector<1x16x16xf32>
    %19 = arith.addf %16, %18 : vector<1x16x16xf32>
    %cst_12 = arith.constant 0.000000e+00 : f32
    %20 = vector.broadcast %cst_12 : f32 to vector<1x1x16xf32>
    %21 = vector.extract_strided_slice %13 {offsets = [0, 1, 0], sizes = [1, 15, 16], strides = [1, 1, 1]} : vector<1x16x16xf32> to vector<1x15x16xf32>
    %22 = tpu.concatenate %21, %20 in 1 : vector<1x15x16xf32>, vector<1x1x16xf32> -> vector<1x16x16xf32>
    %23 = arith.addf %19, %22 : vector<1x16x16xf32>
    %24 = math.absf %23 : vector<1x16x16xf32>
    %25 = vector.shape_cast %24 : vector<1x16x16xf32> to vector<1x1x16x16xf32>
    %cst_13 = arith.constant dense<0.000000e+00> : vector<1xf32>
    %26 = vector.multi_reduction <add>, %25, %cst_13 [1, 2, 3] : vector<1x1x16x16xf32> to vector<1xf32>
    %27 = vector.shape_cast %26 : vector<1xf32> to vector<1x1x1x1xf32>
    %28 = vector.extract %27[0, 0, 0, 0] : f32 from vector<1x1x1x1xf32>
    %29 = vector.broadcast %28 : f32 to vector<1x8x128xf32>
    %c0_14 = arith.constant 0 : index
    %c0_15 = arith.constant 0 : index
    %c0_16 = arith.constant 0 : index
    %30 = vector.load %arg4[%c0_14, %c0_15, %c0_16] : memref<1x8x128xf32, #tpu.memory_space<vmem>>, vector<1x8x128xf32>
    tpu.vector_store %arg4[%c0_14, %c0_15, %c0_16], %29 {strides = array<i32>} : memref<1x8x128xf32, #tpu.memory_space<vmem>>, vector<1x8x128xf32>,
    return
  }
  func.func @transform_0(%arg0: i32) -> (i32, i32, i32) {
    %c0_i32 = arith.constant 0 : i32
    %c0_i32_0 = arith.constant 0 : i32
    %c0_i32_1 = arith.constant 0 : i32
    return %arg0, %c0_i32, %c0_i32_0 : i32, i32, i32
  }
  func.func @transform_1(%arg0: i32) -> (i32, i32, i32) {
    %c0_i32 = arith.constant 0 : i32
    %c0_i32_0 = arith.constant 0 : i32
    %c0_i32_1 = arith.constant 0 : i32
    return %arg0, %c0_i32, %c0_i32_0 : i32, i32, i32
  }
  func.func @transform_2(%arg0: i32) -> (i32, i32, i32) {
    %c0_i32 = arith.constant 0 : i32
    %c0_i32_0 = arith.constant 0 : i32
    %c0_i32_1 = arith.constant 0 : i32
    return %arg0, %c0_i32, %c0_i32_0 : i32, i32, i32
  }
  func.func @transform_3(%arg0: i32) -> (i32, i32, i32) {
    %c0_i32 = arith.constant 0 : i32
    %c0_i32_0 = arith.constant 0 : i32
    %c0_i32_1 = arith.constant 0 : i32
    return %arg0, %c0_i32, %c0_i32_0 : i32, i32, i32
  }
}

</mosaic_0001>

<llo_original>
// kernel: tpu_custom_call.1
$region0: #{tpu_custom_call.1}
  #allocation0 [shape = 'u32[]', space=smem, size = 0x4, offset = 0x4, fixed_abs, tag = 'smem constant byte address 0x4 - core index']
  #allocation1 [shape = 'u32[72,128]{1,0:T(1,128)}', space=vmem, size = 0x9000, scoped, tag = 'internal scratch']
  %s0 = inlined_call_operand.hbm [shape: f32[2,16,16], index: 0, kind: input, shape index: {}]
  %s1 = inlined_call_operand.hbm [shape: f32[2,16,16], index: 1, kind: input, shape index: {}]
  %s2 = inlined_call_operand.hbm [shape: f32[2,16,16], index: 2, kind: input, shape index: {}]
  %s3 = inlined_call_operand.hbm [shape: f32[2,8,128], index: 3, kind: output, shape index: {}]
  %s4 = sld [smem:[#allocation0]]
  $region57: #{tpu_custom_call.1} parent=0
    _
  %s6 = ssub.s32 1, %s4
  %s7 = scalar_select 0, %s6, %s4
  $region1: #{tpu_custom_call.1} parent=0
    #allocation2 [shape = 'u8[16384]{0}', space=vmem, size = 0x4000, scoped, tag = 'input window, operand 0']
    #allocation3 [shape = 's32[2]{0}', space=sflag, size = 0x8, scoped, tag = 'scoped memory for tpu_custom_call.1']
    #allocation4 [shape = 's32[2]{0}', space=sflag, size = 0x8, scoped, tag = 'scoped memory for tpu_custom_call.1']
    #allocation5 [shape = 'u8[16384]{0}', space=vmem, size = 0x4000, scoped, tag = 'input window, operand 1']
    #allocation6 [shape = 's32[2]{0}', space=sflag, size = 0x8, scoped, tag = 'scoped memory for tpu_custom_call.1']
    #allocation7 [shape = 'u8[16384]{0}', space=vmem, size = 0x4000, scoped, tag = 'input window, operand 2']
    #allocation8 [shape = 'u8[8192]{0}', space=vmem, size = 0x2000, scoped, tag = 'output window, operand 0']
    %8 = vsyncpa [#allocation3], 0
    %s9 = scalar_lea.sflag [#allocation3], 1
    %10 = vsyncpa %s9, 0
    %11 = vsyncpa [#allocation6], 0
    %s12 = scalar_lea.sflag [#allocation6], 1
    %13 = vsyncpa %s12, 0
    %14 = vsyncpa [#allocation4], 0
    %s15 = scalar_lea.sflag [#allocation4], 1
    %16 = vsyncpa %s15, 0
    loop: start=0, step=1, limit=4
    $region2: #{tpu_custom_call.1} parent=1 // loop_pre_header
      _
    $region3: #{tpu_custom_call.1} parent=1 // loop_header
      %s18 = sphi 0, %s22
      %p19 = scmp.ge.s32.totalorder %s18, 4
      %s28 = sphi 0, %s30
      %s31 = sphi 0, %s28
      %s32 = sphi 0, %s31
      %s48 = sphi 0, %s32
      %s54 = sphi 0, %s56
      %s57 = sphi 0, %s54
      %s58 = sphi 0, %s57
      %s74 = sphi 0, %s58
      %s80 = sphi 0, %s82
      %s83 = sphi 0, %s80
      %s84 = sphi 0, %s83
      %s100 = sphi 0, %s84
      %s106 = sphi 0, %s108
      %s109 = sphi 0, %s106
      %s110 = sphi 0, %s109
      %s126 = sphi 0, %s110
    $region4: #{tpu_custom_call.1} parent=1 // loop_header_branch
      %21 = sbr.rel (%p19) target = $region8
    $region5: #{tpu_custom_call.1} parent=1 // loop_body
      %s23 = ssub.s32 %s18, 1
      %s24 = ssub.s32 %s18, 2
      %s25 = sadd.s32 %s18, 1
      %s26 = ssub.s32 %s18, %s25
      %p27 = scmp.eq.s32.totalorder %s26, 0
      %s29 = sadd.s32 %s28, 1
      %s30 = scalar_select %p27, %s28, %s29
      %p33 = pneg %p27
      %p34 = scmp.eq.s32.totalorder %s18, 1
      %p35 = por %p33, %p34
      %p36 = scmp.ne.s32.totalorder %s28, %s31
      %p37 = scmp.eq.s32.totalorder %s18, 0
      %p38 = por %p36, %p37
      %p39 = scmp.ne.s32.totalorder %s28, %s31
      %p40 = scmp.eq.s32.totalorder %s23, 1
      %p41 = por %p39, %p40
      %p42 = scmp.ne.s32.totalorder %s31, %s32
      %p43 = scmp.eq.s32.totalorder %s23, 0
      %p44 = por %p42, %p43
      %p45 = scmp.ne.s32.totalorder %s31, %s32
      %p46 = scmp.eq.s32.totalorder %s24, 1
      %p47 = por %p45, %p46
      %p49 = scmp.ne.s32.totalorder %s32, %s48
      %p50 = scmp.eq.s32.totalorder %s24, 0
      %p51 = por %p49, %p50
      %s52 = ssub.s32 %s18, %s25
      %p53 = scmp.eq.s32.totalorder %s52, 0
      %s55 = sadd.s32 %s54, 1
      %s56 = scalar_select %p53, %s54, %s55
      %p59 = pneg %p53
      %p60 = scmp.eq.s32.totalorder %s18, 1
      %p61 = por %p59, %p60
      %p62 = scmp.ne.s32.totalorder %s54, %s57
      %p63 = scmp.eq.s32.totalorder %s18, 0
      %p64 = por %p62, %p63
      %p65 = scmp.ne.s32.totalorder %s54, %s57
      %p66 = scmp.eq.s32.totalorder %s23, 1
      %p67 = por %p65, %p66
      %p68 = scmp.ne.s32.totalorder %s57, %s58
      %p69 = scmp.eq.s32.totalorder %s23, 0
      %p70 = por %p68, %p69
      %p71 = scmp.ne.s32.totalorder %s57, %s58
      %p72 = scmp.eq.s32.totalorder %s24, 1
      %p73 = por %p71, %p72
      %p75 = scmp.ne.s32.totalorder %s58, %s74
      %p76 = scmp.eq.s32.totalorder %s24, 0
      %p77 = por %p75, %p76
      %s78 = ssub.s32 %s18, %s25
      %p79 = scmp.eq.s32.totalorder %s78, 0
      %s81 = sadd.s32 %s80, 1
      %s82 = scalar_select %p79, %s80, %s81
      %p85 = pneg %p79
      %p86 = scmp.eq.s32.totalorder %s18, 1
      %p87 = por %p85, %p86
      %p88 = scmp.ne.s32.totalorder %s80, %s83
      %p89 = scmp.eq.s32.totalorder %s18, 0
      %p90 = por %p88, %p89
      %p91 = scmp.ne.s32.totalorder %s80, %s83
      %p92 = scmp.eq.s32.totalorder %s23, 1
      %p93 = por %p91, %p92
      %p94 = scmp.ne.s32.totalorder %s83, %s84
      %p95 = scmp.eq.s32.totalorder %s23, 0
      %p96 = por %p94, %p95
      %p97 = scmp.ne.s32.totalorder %s83, %s84
      %p98 = scmp.eq.s32.totalorder %s24, 1
      %p99 = por %p97, %p98
      %p101 = scmp.ne.s32.totalorder %s84, %s100
      %p102 = scmp.eq.s32.totalorder %s24, 0
      %p103 = por %p101, %p102
      %s104 = ssub.s32 %s18, %s25
      %p105 = scmp.eq.s32.totalorder %s104, 0
      %s107 = sadd.s32 %s106, 1
      %s108 = scalar_select %p105, %s106, %s107
      %p111 = pneg %p105
      %p112 = scmp.eq.s32.totalorder %s18, 1
      %p113 = por %p111, %p112
      %p114 = scmp.ne.s32.totalorder %s106, %s109
      %p115 = scmp.eq.s32.totalorder %s18, 0
      %p116 = por %p114, %p115
      %p117 = scmp.ne.s32.totalorder %s106, %s109
      %p118 = scmp.eq.s32.totalorder %s23, 1
      %p119 = por %p117, %p118
      %p120 = scmp.ne.s32.totalorder %s109, %s110
      %p121 = scmp.eq.s32.totalorder %s23, 0
      %p122 = por %p120, %p121
      %p123 = scmp.ne.s32.totalorder %s109, %s110
      %p124 = scmp.eq.s32.totalorder %s24, 1
      %p125 = por %p123, %p124
      %p127 = scmp.ne.s32.totalorder %s110, %s126
      %p128 = scmp.eq.s32.totalorder %s24, 0
      %p129 = por %p127, %p128
      %p130 = scmp.le.s32.totalorder 1, %s18
      %p131 = scmp.lt.s32.totalorder %s18, 3
      %p132 = pnand %p130, %p131
      %p133 = pneg %p132
      // Predicated region
      $region9: #{tpu_custom_call.1} parent=5 // pred_check
        _
      $region10: #{tpu_custom_call.1} parent=5 // pred_check_branch
        %135 = sbr.rel (%p132) target = $region12
      $region11: #{tpu_custom_call.1} parent=5 // pred_region
        %s136 = ssub.s32 %s18, 1
      $region12: #{tpu_custom_call.1} parent=5 // pred_fallthru
        _
      %p137 = scmp.lt.s32.totalorder %s18, 2
      // Predicated region
      $region13: #{tpu_custom_call.1} parent=5 // pred_check
        %p138 = pneg %p137
      $region14: #{tpu_custom_call.1} parent=5 // pred_check_branch
        %140 = sbr.rel (%p138) target = $region16
      $region15: #{tpu_custom_call.1} parent=5 // pred_region
        // Predicated region
        $region17: #{tpu_custom_call.1} parent=15 // pred_check
          %p141 = pneg %p38
        $region18: #{tpu_custom_call.1} parent=15 // pred_check_branch
          %143 = sbr.rel (%p141) target = $region20
        $region19: #{tpu_custom_call.1} parent=15 // pred_region
          %s144 = sand.u32 %s28, 1
          %s145 = scalar_lea.sflag [#allocation3], %s144
          %s146 = sand.u32 %s28, 1
          %s147 = smul.addr %s146, 16
          %s148 = scalar_lea.vmem [#allocation2], %s147
          %150 = vsyncadd %s145, 0
          %s151 = smul.addr %s18, 2
          %s152 = smul.addr %s151, 8
          %s153 = scalar_lea.hbm %s0, %s152
          %s154 = sshll.u32 %s153, 4
          %s155 = int_to_ptr.hbm [resolvable:$true] %s154
          %s156 = sshll.u32 %s148, 4
          %s157 = int_to_ptr.vmem [resolvable:$true] %s156
          %162 = dma.hbm_to_vmem [thread:$0]  %s155, 256, %s157, %s145, 128, 128, 8
        $region20: #{tpu_custom_call.1} parent=15 // pred_fallthru
          _
        // Predicated region
        $region21: #{tpu_custom_call.1} parent=15 // pred_check
          %p163 = pneg %p64
        $region22: #{tpu_custom_call.1} parent=15 // pred_check_branch
          %165 = sbr.rel (%p163) target = $region24
        $region23: #{tpu_custom_call.1} parent=15 // pred_region
          %s166 = sand.u32 %s18, 1
          %s167 = scalar_lea.sflag [#allocation6], %s166
          %s168 = sand.u32 %s54, 1
          %s169 = smul.addr %s168, 16
          %s170 = scalar_lea.vmem [#allocation5], %s169
          %172 = vsyncadd %s167, 0
          %s173 = smul.addr %s18, 2
          %s174 = smul.addr %s173, 8
          %s175 = scalar_lea.hbm %s1, %s174
          %s176 = sshll.u32 %s175, 4
          %s177 = int_to_ptr.hbm [resolvable:$true] %s176
          %s178 = sshll.u32 %s170, 4
          %s179 = int_to_ptr.vmem [resolvable:$true] %s178
          %184 = dma.hbm_to_vmem [thread:$0]  %s177, 256, %s179, %s167, 128, 128, 8
        $region24: #{tpu_custom_call.1} parent=15 // pred_fallthru
          _
        // Predicated region
        $region25: #{tpu_custom_call.1} parent=15 // pred_check
          %p185 = pneg %p90
        $region26: #{tpu_custom_call.1} parent=15 // pred_check_branch
          %187 = sbr.rel (%p185) target = $region28
        $region27: #{tpu_custom_call.1} parent=15 // pred_region
          %s188 = sand.u32 %s18, 1
          %s189 = scalar_lea.sflag [#allocation6], %s188
          %s190 = sand.u32 %s80, 1
          %s191 = smul.addr %s190, 16
          %s192 = scalar_lea.vmem [#allocation7], %s191
          %194 = vsyncadd %s189, 0
          %s195 = smul.addr %s18, 2
          %s196 = smul.addr %s195, 8
          %s197 = scalar_lea.hbm %s2, %s196
          %s198 = sshll.u32 %s197, 4
          %s199 = int_to_ptr.hbm [resolvable:$true] %s198
          %s200 = sshll.u32 %s192, 4
          %s201 = int_to_ptr.vmem [resolvable:$true] %s200
          %206 = dma.hbm_to_vmem [thread:$0]  %s199, 256, %s201, %s189, 128, 128, 8
        $region28: #{tpu_custom_call.1} parent=15 // pred_fallthru
          _
      $region16: #{tpu_custom_call.1} parent=5 // pred_fallthru
        _
      %p207 = scmp.le.s32.totalorder 1, %s18
      %p208 = scmp.lt.s32.totalorder %s18, 3
      %p209 = pnand %p207, %p208
      %p210 = pneg %p209
      // Predicated region
      $region29: #{tpu_custom_call.1} parent=5 // pred_check
        _
      $region30: #{tpu_custom_call.1} parent=5 // pred_check_branch
        %212 = sbr.rel (%p209) target = $region32
      $region31: #{tpu_custom_call.1} parent=5 // pred_region
        %s213 = ssub.s32 %s18, 1
        %s214 = sand.u32 %s31, 1
        %s215 = scalar_lea.sflag [#allocation3], %s214
        %s216 = sand.u32 %s31, 1
        %s217 = smul.addr %s216, 16
        %s218 = scalar_lea.vmem [#allocation2], %s217
        // Predicated region
        $region33: #{tpu_custom_call.1} parent=31 // pred_check
          %p219 = pneg %p44
        $region34: #{tpu_custom_call.1} parent=31 // pred_check_branch
          %221 = sbr.rel (%p219) target = $region36
        $region35: #{tpu_custom_call.1} parent=31 // pred_region
          %223 = dma.done %s215, 256
        $region36: #{tpu_custom_call.1} parent=31 // pred_fallthru
          _
        %s224 = sand.u32 %s23, 1
        %s225 = scalar_lea.sflag [#allocation6], %s224
        %s226 = sand.u32 %s57, 1
        %s227 = smul.addr %s226, 16
        %s228 = scalar_lea.vmem [#allocation5], %s227
        // Predicated region
        $region37: #{tpu_custom_call.1} parent=31 // pred_check
          %p229 = pneg %p70
        $region38: #{tpu_custom_call.1} parent=31 // pred_check_branch
          %231 = sbr.rel (%p229) target = $region40
        $region39: #{tpu_custom_call.1} parent=31 // pred_region
          %233 = dma.done %s225, 256
        $region40: #{tpu_custom_call.1} parent=31 // pred_fallthru
          _
        %s234 = sand.u32 %s23, 1
        %s235 = scalar_lea.sflag [#allocation6], %s234
        %s236 = sand.u32 %s83, 1
        %s237 = smul.addr %s236, 16
        %s238 = scalar_lea.vmem [#allocation7], %s237
        // Predicated region
        $region41: #{tpu_custom_call.1} parent=31 // pred_check
          %p239 = pneg %p96
        $region42: #{tpu_custom_call.1} parent=31 // pred_check_branch
          %241 = sbr.rel (%p239) target = $region44
        $region43: #{tpu_custom_call.1} parent=31 // pred_region
          %243 = dma.done %s235, 256
        $region44: #{tpu_custom_call.1} parent=31 // pred_fallthru
          _
        %s244 = sand.u32 %s31, 1
        %s245 = scalar_lea.sflag [#allocation3], %s244
        %s246 = sand.u32 %s31, 1
        %s247 = smul.addr %s246, 16
        %s248 = scalar_lea.vmem [#allocation2], %s247
        %p249 = pneg %p44
        %p250 = pneg %p41
        %s251 = sand.u32 %s23, 1
        %s252 = scalar_lea.sflag [#allocation6], %s251
        %s253 = sand.u32 %s57, 1
        %s254 = smul.addr %s253, 16
        %s255 = scalar_lea.vmem [#allocation5], %s254
        %p256 = pneg %p70
        %p257 = pneg %p67
        %s258 = sand.u32 %s23, 1
        %s259 = scalar_lea.sflag [#allocation6], %s258
        %s260 = sand.u32 %s83, 1
        %s261 = smul.addr %s260, 16
        %s262 = scalar_lea.vmem [#allocation7], %s261
        %p263 = pneg %p96
        %p264 = pneg %p93
        %p265 = pneg %p122
        %p266 = pneg %p119
        %s267 = sand.u32 %s109, 1
        %s268 = scalar_lea.sflag [#allocation4], %s267
        %s269 = sand.u32 %s109, 1
        %s270 = smul.addr %s269, 8
        %s271 = scalar_lea.vmem [#allocation8], %s270
        %v272 = vld [vmem:[%s218] sm:$0xff]
        %v273 = vld [vmem:[%s218 + $0x8] sm:$0xff]
        %v274 = vld [vmem:[%s228] sm:$0xff]
        %v275 = vld [vmem:[%s228 + $0x8] sm:$0xff]
        %v276 = vld [vmem:[%s238] sm:$0xff]
        %v277 = vld [vmem:[%s238 + $0x8] sm:$0xff]
        %v278 = vadd.f32 %v276, 1.0
        %v279 = vadd.f32 %v277, 1.0
        %v280 = vsub.f32 %v272, %v274
        %v281 = vsub.f32 %v273, %v275
        %v282 = vmul.f32 %v280, %v278
        %v283 = vmul.f32 %v281, %v279
        %286 = vrot.lane.b32.xlu0 %v282, 1
        %v287 = vpop.permute.xlu0 %286
        %288 = vrot.lane.b32.xlu0 %v283, 1
        %v289 = vpop.permute.xlu0 %288
        %vm292 = vcmask 7168
        %v293 = vsel %vm292, 0.0, %v287
        %v294 = vsel %vm292, 0.0, %v289
        %295 = vrot.lane.b32.xlu0 %v282, 127
        %v296 = vpop.permute.xlu0 %295
        %297 = vrot.lane.b32.xlu0 %v283, 127
        %v298 = vpop.permute.xlu0 %297
        %vm301 = vcmask 121856
        %v302 = vsel %vm301, %v296, 0.0
        %v303 = vsel %vm301, %v298, 0.0
        %v304 = vsub.f32 %v293, %v302
        %v305 = vsub.f32 %v294, %v303
        %vm308 = vcmask 1040384
        %v309 = vrot.slane %v304, 7
        %v310 = vrot.slane %v305, 7
        %v311 = vsel %vm308, %v309, %v310
        %v314 = vsel %vm308, 0.0, %v309
        %v315 = vmul.f32 %v304, 2.0
        %v316 = vmul.f32 %v305, 2.0
        %v317 = vadd.f32 %v314, %v315
        %v318 = vadd.f32 %v311, %v316
        %vm319 = vcmask 1046528
        %v320 = vrot.slane %v304, 1
        %v321 = vrot.slane %v305, 1
        %v322 = vsel %vm319, %v320, %v321
        %v325 = vsel %vm319, %v321, 0.0
        %v326 = vadd.f32 %v317, %v322
        %v327 = vadd.f32 %v318, %v325
        %v328 = vand.u32 2147483647, %v326
        %v329 = vand.u32 2147483647, %v327
        %vm330 = vcmask 130048
        %v331 = vsel %vm330, %v328, 0.0
        %v332 = vsel %vm330, %v329, 0.0
        %v333 = vadd.f32 %v331, %v332
        %334 = vadd.xlane.f32.xlu0 %v333
        %v335 = vpop.xlane.xlu0 %334
        %v336 = vrot.slane %v335, 4
        %v337 = vadd.f32 %v335, %v336
        %v338 = vrot.slane %v337, 2
        %v339 = vadd.f32 %v337, %v338
        %v340 = vrot.slane %v339, 1
        %v341 = vadd.f32 %v339, %v340
        %s342 = vtos %v341
        %v343 = vstv %s342
        %344 = vst [vmem:[%s271] sm:$0xff] %v343
        %s345 = sand.u32 %s109, 1
        %s346 = scalar_lea.sflag [#allocation4], %s345
        %s347 = sand.u32 %s109, 1
        %s348 = smul.addr %s347, 8
        %s349 = scalar_lea.vmem [#allocation8], %s348
        // Predicated region
        $region45: #{tpu_custom_call.1} parent=31 // pred_check
          %p350 = pneg %p119
        $region46: #{tpu_custom_call.1} parent=31 // pred_check_branch
          %352 = sbr.rel (%p350) target = $region48
        $region47: #{tpu_custom_call.1} parent=31 // pred_region
          %354 = vsyncadd %s346, 0
          %s355 = smul.addr %s23, 8
          %s356 = scalar_lea.hbm %s3, %s355
          %s358 = sshll.u32 %s349, 4
          %s359 = int_to_ptr.vmem [resolvable:$true] %s358
          %s360 = sshll.u32 %s356, 4
          %s361 = int_to_ptr.hbm [resolvable:$true] %s360
          %363 = dma.vmem_to_hbm [thread:$0]  %s359, 128, %s361, %s346
        $region48: #{tpu_custom_call.1} parent=31 // pred_fallthru
          _
      $region32: #{tpu_custom_call.1} parent=5 // pred_fallthru
        _
      %p364 = scmp.le.s32.totalorder 2, %s18
      // Predicated region
      $region49: #{tpu_custom_call.1} parent=5 // pred_check
        %p365 = pneg %p364
      $region50: #{tpu_custom_call.1} parent=5 // pred_check_branch
        %367 = sbr.rel (%p365) target = $region52
      $region51: #{tpu_custom_call.1} parent=5 // pred_region
        %s368 = ssub.s32 %s18, 2
        // Predicated region
        $region53: #{tpu_custom_call.1} parent=51 // pred_check
          %p369 = pneg %p125
        $region54: #{tpu_custom_call.1} parent=51 // pred_check_branch
          %371 = sbr.rel (%p369) target = $region56
        $region55: #{tpu_custom_call.1} parent=51 // pred_region
          %s372 = sand.u32 %s110, 1
          %s373 = scalar_lea.sflag [#allocation4], %s372
          %s374 = sand.u32 %s110, 1
          %s375 = smul.addr %s374, 8
          %s376 = scalar_lea.vmem [#allocation8], %s375
          %378 = dma.done %s373, 128
        $region56: #{tpu_custom_call.1} parent=51 // pred_fallthru
          _
      $region52: #{tpu_custom_call.1} parent=5 // pred_fallthru
        _
    $region6: #{tpu_custom_call.1} parent=1 // loop_footer
      %s22 = sadd.s32 1, %s18
    $region7: #{tpu_custom_call.1} parent=1 // loop_footer_branch
      %17 = sbr.rel target = $region3
    $region8: #{tpu_custom_call.1} parent=1 // loop_exit
      _
    %379 = vsyncpa [#allocation3], 1
    %s380 = scalar_lea.sflag [#allocation3], 1
    %381 = vsyncpa %s380, 1
    %382 = vsyncpa [#allocation6], 1
    %s383 = scalar_lea.sflag [#allocation6], 1
    %384 = vsyncpa %s383, 1
    %385 = vsyncpa [#allocation4], 1
    %s386 = scalar_lea.sflag [#allocation4], 1
    %387 = vsyncpa %s386, 1

</llo_original>
